<compile_context>
chip_gen: v6e
topology: v6e:2x2x1
jax: 0.10.0
libtpu: 0.0.40
codegen_flags: <defaults>
</compile_context>

<pallas_src>
import math

import jax
import jax.numpy as jnp
from jax import lax
from jax.experimental import pallas as pl
from jax.experimental.pallas import tpu as pltpu

H_DIM = 64  # hidden dim hard-coded in the PyTorch module


def _width_attention_kernel(x_ref, wc_ref, bc_ref, wlf_ref, blf_ref,
                            o_ref, a_ref):
    """One block of TB batch elements per grid step.

    x_ref   : (TB, C, HW)  NCHW input with spatial dims flattened (lane-dense)
    wc_ref  : (64, C)      BN-folded 1x1 conv weight
    bc_ref  : (64, 1)      BN-folded conv bias
    wlf_ref : (64, HW)     linear weight tiled H times, scaled by 1/HW (pool)
    blf_ref : (1, HW)      linear bias tiled H times
    o_ref   : (TB, C, HW)  output = x * attention
    a_ref   : (TB, 1, HW)  attention tiled H times (wrapper slices [:W])
    """
    tb = x_ref.shape[0]

    wc = wc_ref[...]        # (64, C)
    bc = bc_ref[...]        # (64, 1)
    wlf = wlf_ref[...]      # (64, HW)  (includes the 1/HW mean factor)
    blf = blf_ref[...]      # (1, HW)

    def body(b, carry):
        x2d = x_ref[b].astype(jnp.float32)                          # (C, HW)

        # 1x1 conv (+ folded eval-mode BN) == contraction over C (MXU);
        # result laid out (64, HW) so the spatial reduce below runs on lanes.
        y = jnp.dot(wc, x2d, preferred_element_type=jnp.float32) + bc
        # NOTE: a bf16 SiLU path would halve EUP cost on v6e/v7x; kept in f32
        # so numerics match the PyTorch module (and v5e has no bf16 VPU/EUP).
        y = y * jax.nn.sigmoid(y)                                   # SiLU (64, HW)

        # AdaptiveAvgPool2d((1,1)) + Flatten + Linear + Sigmoid.
        # The 1/HW mean factor is folded into wlf by the wrapper, so pooling
        # is a plain lane-axis sum; wlf is pre-tiled H times, so the logits
        # come out already broadcast to HW: logits[h*W + w] == (feat @ wl)[w].
        feat = jnp.sum(y, axis=1, keepdims=True)                    # (64, 1)
        logits = jnp.sum(feat * wlf, axis=0, keepdims=True) + blf   # (1, HW)
        attn = jax.nn.sigmoid(logits)                               # (1, HW)

        a_ref[b] = attn.astype(a_ref.dtype)                         # (1, HW)
        # x * attention.unsqueeze(1).unsqueeze(1): broadcast over C (sublanes)
        # and H (already baked into the HW-tiled attention), scale along W.
        o_ref[b] = (x2d * attn).astype(o_ref.dtype)                 # (C, HW)
        return carry

    lax.fori_loop(0, tb, body, None, unroll=True)


def _choose_batch_block(batch, per_b_bytes, target_bytes=2 << 20):
    """Pick TB so the per-step block is ~target_bytes, TB | B, and (when
    possible) the grid keeps >= 2 parallel steps for v7x's two TensorCores."""
    tb = max(1, min(batch, target_bytes // max(per_b_bytes, 1)))
    if batch >= 2:
        tb = min(tb, batch // 2)
    tb = max(1, tb)
    while batch % tb:
        tb -= 1
    return tb


def width_attention(x, params):
    """x: (B, C, H, W). Returns (out, attn) with out.shape == x.shape and
    attn.shape == (B, width) where width == W (the captured hook output)."""
    wc, bc, wl_t, bl = params
    B, C, H, W = x.shape
    width = wl_t.shape[1]
    assert width == W, "the broadcast `x * attention` requires width == W"
    HW = H * W

    # Free contiguous reshape: NCHW -> (B, C, H*W); lane dim = HW >= 128.
    x2 = x.reshape(B, C, HW)

    # Pre-tile the linear weight/bias H times along the output axis so the
    # in-kernel attention is already broadcast to length HW; fold the 1/HW
    # AdaptiveAvgPool mean factor into the (small, constant) weight.
    wlf = jnp.tile(wl_t, (1, H)) * jnp.float32(1.0 / HW)   # (64, HW)
    blf = jnp.tile(bl, (1, H))                             # (1, HW)

    tb = _choose_batch_block(B, C * HW * x.dtype.itemsize)
    grid = (B // tb,)

    # Explicit VMEM budget (double-buffered in/out blocks + resident weights),
    # with headroom; capped at 64 MiB so the same kernel is safe on v7x.
    io_block = tb * C * HW * 4
    attn_block = tb * HW * 4
    weight_bytes = (H_DIM * C + H_DIM + H_DIM * HW + HW) * 4
    vmem_limit = int(min(64 << 20,
                         max(2 * (2 * io_block + attn_block)
                             + 2 * weight_bytes + (1 << 20),
                             8 << 20)))

    out2, attn_full = pl.pallas_call(
        _width_attention_kernel,
        out_shape=(
            jax.ShapeDtypeStruct((B, C, HW), x.dtype),
            jax.ShapeDtypeStruct((B, 1, HW), jnp.float32),
        ),
        grid_spec=pltpu.PrefetchScalarGridSpec(
            num_scalar_prefetch=0,
            grid=grid,
            in_specs=[
                pl.BlockSpec((tb, C, HW), lambda b: (b, 0, 0)),
                pl.BlockSpec((H_DIM, C), lambda b: (0, 0)),
                pl.BlockSpec((H_DIM, 1), lambda b: (0, 0)),
                pl.BlockSpec((H_DIM, HW), lambda b: (0, 0)),
                pl.BlockSpec((1, HW), lambda b: (0, 0)),
            ],
            out_specs=[
                pl.BlockSpec((tb, C, HW), lambda b: (b, 0, 0)),
                pl.BlockSpec((tb, 1, HW), lambda b: (b, 0, 0)),
            ],
        ),
        compiler_params=pltpu.CompilerParams(
            dimension_semantics=("parallel",),
            vmem_limit_bytes=vmem_limit),
    )(x2, wc, bc, wlf, blf)

    out = out2.reshape(B, C, H, W)
    attn = attn_full[:, 0, :W]            # first W lanes == the true attention
    return out, attn


def init_params(key, in_ch, width):
    """Deterministic init mirroring nn.Conv2d / nn.Linear defaults, with
    eval-mode BatchNorm folded into the 1x1 conv."""
    ks = jax.random.split(key, 8)
    eps = 1e-5

    # Conv2d(in_ch, 64, kernel_size=1): weight (64, in_ch, 1, 1), bias (64,)
    bound_c = 1.0 / math.sqrt(in_ch)
    conv_w = jax.random.uniform(ks[0], (H_DIM, in_ch), jnp.float32,
                                -bound_c, bound_c)
    conv_b = jax.random.uniform(ks[1], (H_DIM,), jnp.float32,
                                -bound_c, bound_c)

    # BatchNorm2d(64) params / running stats (perturbed so the fold matters).
    bn_gamma = 1.0 + 0.1 * jax.random.normal(ks[2], (H_DIM,), jnp.float32)
    bn_beta = 0.1 * jax.random.normal(ks[3], (H_DIM,), jnp.float32)
    bn_mean = 0.05 * jax.random.normal(ks[4], (H_DIM,), jnp.float32)
    bn_var = jnp.abs(1.0 + 0.1 * jax.random.normal(ks[5], (H_DIM,), jnp.float32))

    # Linear(64, width): weight (width, 64), bias (width,)
    bound_l = 1.0 / math.sqrt(H_DIM)
    lin_w = jax.random.uniform(ks[6], (width, H_DIM), jnp.float32,
                               -bound_l, bound_l)
    lin_b = jax.random.uniform(ks[7], (width,), jnp.float32,
                               -bound_l, bound_l)

    # Fold eval-mode BN into the 1x1 conv.
    scale = bn_gamma / jnp.sqrt(bn_var + eps)                      # (64,)
    wc = conv_w * scale[:, None]                                   # (64, C)
    bc = ((conv_b - bn_mean) * scale + bn_beta).reshape(H_DIM, 1)  # (64, 1)
    wl_t = lin_w.T                                                 # (64, width)
    bl = lin_b.reshape(1, width)                                   # (1, width)
    return wc, bc, wl_t, bl


def reference(x, wc, bc, wl_t, bl):
    """Pure-JAX reference of the (BN-folded, eval-mode) forward pass."""
    y = jnp.einsum('oc,bchw->bohw', wc, x) + bc.reshape(1, H_DIM, 1, 1)
    y = y * jax.nn.sigmoid(y)                                      # SiLU
    feat = jnp.mean(y, axis=(2, 3))                                # (B, 64)
    attn = jax.nn.sigmoid(feat @ wl_t + bl)                        # (B, width)
    return x * attn[:, None, None, :], attn


if __name__ == "__main__":
    B, C, H, W = 2, 4, 16, 16
    width = W  # the broadcast `x * attention` requires width == W

    key = jax.random.PRNGKey(0)
    kx, kp = jax.random.split(key)
    x = jax.random.normal(kx, (B, C, H, W), jnp.float32)
    params = init_params(kp, C, width)

    out, attn = width_attention(x, params)
    out = jax.block_until_ready(out)
    attn = jax.block_until_ready(attn)

    ref_out, ref_attn = reference(x, *params)
    assert out.shape == (B, C, H, W) and out.dtype == x.dtype
    assert attn.shape == (B, width)
    assert jnp.allclose(out, ref_out, atol=1e-5, rtol=1e-5)
    assert jnp.allclose(attn, ref_attn, atol=1e-5, rtol=1e-5)

    print("KERNEL_OK")
</pallas_src>

<mosaic_0001>
module attributes {stable_mosaic.version = 11 : i64} {
  func.func @_width_attention_kernel(%arg0: i32, %arg1: memref<1x4x256xf32, #tpu.memory_space<vmem>>, %arg2: memref<64x4xf32, #tpu.memory_space<vmem>>, %arg3: memref<64x1xf32, #tpu.memory_space<vmem>>, %arg4: memref<64x256xf32, #tpu.memory_space<vmem>>, %arg5: memref<1x256xf32, #tpu.memory_space<vmem>>, %arg6: memref<1x4x256xf32, #tpu.memory_space<vmem>>, %arg7: memref<1x1x256xf32, #tpu.memory_space<vmem>>) attributes {dimension_semantics = [#tpu.dimension_semantics<parallel>], iteration_bounds = array<i64: 2>, scalar_prefetch = 0 : i64, scratch_operands = 0 : i64, tpu.core_type = #tpu.core_type<tc>, window_params = [{transform_indices = @transform_0, window_bounds = array<i64: 1, 4, 256>}, {pipeline_mode = #tpu.pipeline_mode<synchronous>, transform_indices = @transform_1, window_bounds = array<i64: 64, 4>}, {pipeline_mode = #tpu.pipeline_mode<synchronous>, transform_indices = @transform_2, window_bounds = array<i64: 64, 1>}, {pipeline_mode = #tpu.pipeline_mode<synchronous>, transform_indices = @transform_3, window_bounds = array<i64: 64, 256>}, {pipeline_mode = #tpu.pipeline_mode<synchronous>, transform_indices = @transform_4, window_bounds = array<i64: 1, 256>}, {transform_indices = @transform_5, window_bounds = array<i64: 1, 4, 256>}, {transform_indices = @transform_6, window_bounds = array<i64: 1, 1, 256>}]} {
    %c0 = arith.constant 0 : index
    %c0_0 = arith.constant 0 : index
    %0 = vector.load %arg2[%c0, %c0_0] : memref<64x4xf32, #tpu.memory_space<vmem>>, vector<64x4xf32>
    %c0_1 = arith.constant 0 : index
    %c0_2 = arith.constant 0 : index
    %1 = vector.load %arg3[%c0_1, %c0_2] : memref<64x1xf32, #tpu.memory_space<vmem>>, vector<64x1xf32>
    %c0_3 = arith.constant 0 : index
    %c0_4 = arith.constant 0 : index
    %2 = vector.load %arg4[%c0_3, %c0_4] : memref<64x256xf32, #tpu.memory_space<vmem>>, vector<64x256xf32>
    %c0_5 = arith.constant 0 : index
    %c0_6 = arith.constant 0 : index
    %3 = vector.load %arg5[%c0_5, %c0_6] : memref<1x256xf32, #tpu.memory_space<vmem>>, vector<1x256xf32>
    %c0_i32 = arith.constant 0 : i32
    %4 = arith.index_cast %c0_i32 : i32 to index
    %c0_7 = arith.constant 0 : index
    %c0_8 = arith.constant 0 : index
    %5 = vector.load %arg1[%4, %c0_7, %c0_8] : memref<1x4x256xf32, #tpu.memory_space<vmem>>, vector<1x4x256xf32>
    %6 = vector.shape_cast %5 : vector<1x4x256xf32> to vector<4x256xf32>
    %cst = arith.constant dense<0.000000e+00> : vector<64x256xf32>
    %7 = tpu.matmul %0, %6, %cst {dimension_numbers = #tpu.dot_dimension_numbers<[1], [0], [0], [1], [0, 0, 1, 1], [], []>} : vector<64x4xf32>, vector<4x256xf32>, vector<64x256xf32> -> vector<64x256xf32>
    %8 = vector.broadcast %1 : vector<64x1xf32> to vector<64x256xf32>
    %9 = arith.addf %7, %8 : vector<64x256xf32>
    %10 = arith.negf %9 : vector<64x256xf32>
    %11 = math.exp %10 : vector<64x256xf32>
    %cst_9 = arith.constant 1.000000e+00 : f32
    %12 = vector.broadcast %cst_9 : f32 to vector<64x256xf32>
    %13 = arith.addf %12, %11 : vector<64x256xf32>
    %14 = arith.divf %12, %13 : vector<64x256xf32>
    %15 = arith.mulf %9, %14 : vector<64x256xf32>
    %cst_10 = arith.constant dense<0.000000e+00> : vector<64xf32>
    %16 = vector.multi_reduction <add>, %15, %cst_10 [1] : vector<64x256xf32> to vector<64xf32>
    %17 = vector.shape_cast %16 : vector<64xf32> to vector<64x1xf32>
    %18 = vector.broadcast %17 : vector<64x1xf32> to vector<64x256xf32>
    %19 = arith.mulf %18, %2 : vector<64x256xf32>
    %cst_11 = arith.constant dense<0.000000e+00> : vector<256xf32>
    %20 = vector.multi_reduction <add>, %19, %cst_11 [0] : vector<64x256xf32> to vector<256xf32>
    %21 = vector.shape_cast %20 : vector<256xf32> to vector<1x256xf32>
    %22 = arith.addf %21, %3 : vector<1x256xf32>
    %23 = arith.negf %22 : vector<1x256xf32>
    %24 = math.exp %23 : vector<1x256xf32>
    %cst_12 = arith.constant 1.000000e+00 : f32
    %25 = vector.broadcast %cst_12 : f32 to vector<1x256xf32>
    %26 = arith.addf %25, %24 : vector<1x256xf32>
    %27 = arith.divf %25, %26 : vector<1x256xf32>
    %28 = arith.index_cast %c0_i32 : i32 to index
    %c0_13 = arith.constant 0 : index
    %c0_14 = arith.constant 0 : index
    %29 = vector.load %arg7[%28, %c0_13, %c0_14] : memref<1x1x256xf32, #tpu.memory_space<vmem>>, vector<1x1x256xf32>
    %30 = vector.shape_cast %29 : vector<1x1x256xf32> to vector<1x256xf32>
    %31 = vector.shape_cast %27 : vector<1x256xf32> to vector<1x1x256xf32>
    tpu.vector_store %arg7[%28, %c0_13, %c0_14], %31 {strides = array<i32>} : memref<1x1x256xf32, #tpu.memory_space<vmem>>, vector<1x1x256xf32>,
    %32 = vector.broadcast %27 : vector<1x256xf32> to vector<4x256xf32>
    %33 = arith.mulf %6, %32 : vector<4x256xf32>
    %34 = arith.index_cast %c0_i32 : i32 to index
    %c0_15 = arith.constant 0 : index
    %c0_16 = arith.constant 0 : index
    %35 = vector.load %arg6[%34, %c0_15, %c0_16] : memref<1x4x256xf32, #tpu.memory_space<vmem>>, vector<1x4x256xf32>
    %36 = vector.shape_cast %35 : vector<1x4x256xf32> to vector<4x256xf32>
    %37 = vector.shape_cast %33 : vector<4x256xf32> to vector<1x4x256xf32>
    tpu.vector_store %arg6[%34, %c0_15, %c0_16], %37 {strides = array<i32>} : memref<1x4x256xf32, #tpu.memory_space<vmem>>, vector<1x4x256xf32>,
    %c1_i32 = arith.constant 1 : i32
    return
  }
  func.func @transform_0(%arg0: i32) -> (i32, i32, i32) {
    %c0_i32 = arith.constant 0 : i32
    %c0_i32_0 = arith.constant 0 : i32
    %c0_i32_1 = arith.constant 0 : i32
    return %arg0, %c0_i32, %c0_i32_0 : i32, i32, i32
  }
  func.func @transform_1(%arg0: i32) -> (i32, i32) {
    %c0_i32 = arith.constant 0 : i32
    %c0_i32_0 = arith.constant 0 : i32
    %c0_i32_1 = arith.constant 0 : i32
    return %c0_i32, %c0_i32_0 : i32, i32
  }
  func.func @transform_2(%arg0: i32) -> (i32, i32) {
    %c0_i32 = arith.constant 0 : i32
    %c0_i32_0 = arith.constant 0 : i32
    %c0_i32_1 = arith.constant 0 : i32
    return %c0_i32, %c0_i32_0 : i32, i32
  }
  func.func @transform_3(%arg0: i32) -> (i32, i32) {
    %c0_i32 = arith.constant 0 : i32
    %c0_i32_0 = arith.constant 0 : i32
    %c0_i32_1 = arith.constant 0 : i32
    return %c0_i32, %c0_i32_0 : i32, i32
  }
  func.func @transform_4(%arg0: i32) -> (i32, i32) {
    %c0_i32 = arith.constant 0 : i32
    %c0_i32_0 = arith.constant 0 : i32
    %c0_i32_1 = arith.constant 0 : i32
    return %c0_i32, %c0_i32_0 : i32, i32
  }
  func.func @transform_5(%arg0: i32) -> (i32, i32, i32) {
    %c0_i32 = arith.constant 0 : i32
    %c0_i32_0 = arith.constant 0 : i32
    %c0_i32_1 = arith.constant 0 : i32
    return %arg0, %c0_i32, %c0_i32_0 : i32, i32, i32
  }
  func.func @transform_6(%arg0: i32) -> (i32, i32, i32) {
    %c0_i32 = arith.constant 0 : i32
    %c0_i32_0 = arith.constant 0 : i32
    %c0_i32_1 = arith.constant 0 : i32
    return %arg0, %c0_i32, %c0_i32_0 : i32, i32, i32
  }
}

</mosaic_0001>

<llo_original>
// kernel: tpu_custom_call.1
$region0: #{tpu_custom_call.1}
  #allocation0 [shape = 'u32[]', space=smem, size = 0x4, offset = 0x4, fixed_abs, tag = 'smem constant byte address 0x4 - core index']
  #allocation1 [shape = 'u32[144,128]{1,0:T(1,128)}', space=vmem, size = 0x12000, scoped, tag = 'internal scratch']
  %s0 = inlined_call_operand.hbm [shape: f32[2,4,256], index: 0, kind: input, shape index: {}]
  %s1 = inlined_call_operand.vmem [shape: f32[64,4], index: 1, kind: input, shape index: {}]
  %s2 = inlined_call_operand.vmem [shape: f32[64,1], index: 2, kind: input, shape index: {}]
  %s3 = inlined_call_operand.vmem [shape: f32[64,256], index: 3, kind: input, shape index: {}]
  %s4 = inlined_call_operand.vmem [shape: f32[1,256], index: 4, kind: input, shape index: {}]
  %s5 = inlined_call_operand.hbm [shape: f32[2,4,256], index: 5, kind: output, shape index: {0}]
  %s6 = inlined_call_operand.hbm [shape: f32[2,1,256], index: 6, kind: output, shape index: {1}]
  %7 = xla_tuple %s5, %s6
  %s8 = sld [smem:[#allocation0]]
  $region65: #{tpu_custom_call.1} parent=0
    _
  %s10 = ssub.s32 1, %s8
  %s11 = scalar_select 0, %s10, %s8
  $region1: #{tpu_custom_call.1} parent=0
    #allocation2 [shape = 'u8[8192]{0}', space=vmem, size = 0x2000, scoped, tag = 'input window, operand 0']
    #allocation3 [shape = 's32[2]{0}', space=sflag, size = 0x8, scoped, tag = 'scoped memory for tpu_custom_call.1']
    #allocation4 [shape = 's32[2]{0}', space=sflag, size = 0x8, scoped, tag = 'scoped memory for tpu_custom_call.1']
    #allocation5 [shape = 'u8[8192]{0}', space=vmem, size = 0x2000, scoped, tag = 'output window, operand 0']
    #allocation6 [shape = 'u8[2048]{0}', space=vmem, size = 0x800, scoped, tag = 'output window, operand 1']
    #allocation7 [shape = 's32[2]{0}', space=sflag, size = 0x8, scoped, tag = 'scoped memory for tpu_custom_call.1']
    %12 = vsyncpa [#allocation3], 0
    %s13 = scalar_lea.sflag [#allocation3], 1
    %14 = vsyncpa %s13, 0
    %15 = vsyncpa [#allocation4], 0
    %s16 = scalar_lea.sflag [#allocation4], 1
    %17 = vsyncpa %s16, 0
    %18 = vsyncpa [#allocation7], 0
    %s19 = scalar_lea.sflag [#allocation7], 1
    %20 = vsyncpa %s19, 0
    loop: start=0, step=1, limit=4
    $region2: #{tpu_custom_call.1} parent=1 // loop_pre_header
      _
    $region3: #{tpu_custom_call.1} parent=1 // loop_header
      %s22 = sphi 0, %s26
      %p23 = scmp.ge.s32.totalorder %s22, 4
      %s32 = sphi 0, %s34
      %s35 = sphi 0, %s32
      %s36 = sphi 0, %s35
      %s52 = sphi 0, %s36
      %s56 = sphi 0, %s56
      %s58 = sphi 0, %s56
      %s59 = sphi 0, %s58
      %s73 = sphi 0, %s59
      %s77 = sphi 0, %s77
      %s79 = sphi 0, %s77
      %s80 = sphi 0, %s79
      %s94 = sphi 0, %s80
      %s98 = sphi 0, %s98
      %s100 = sphi 0, %s98
      %s101 = sphi 0, %s100
      %s115 = sphi 0, %s101
      %s119 = sphi 0, %s119
      %s121 = sphi 0, %s119
      %s122 = sphi 0, %s121
      %s136 = sphi 0, %s122
      %s142 = sphi 0, %s144
      %s145 = sphi 0, %s142
      %s146 = sphi 0, %s145
      %s162 = sphi 0, %s146
      %s168 = sphi 0, %s170
      %s171 = sphi 0, %s168
      %s172 = sphi 0, %s171
      %s188 = sphi 0, %s172
    $region4: #{tpu_custom_call.1} parent=1 // loop_header_branch
      %25 = sbr.rel (%p23) target = $region8
    $region5: #{tpu_custom_call.1} parent=1 // loop_body
      %s27 = ssub.s32 %s22, 1
      %s28 = ssub.s32 %s22, 2
      %s29 = sadd.s32 %s22, 1
      %s30 = ssub.s32 %s22, %s29
      %p31 = scmp.eq.s32.totalorder %s30, 0
      %s33 = sadd.s32 %s32, 1
      %s34 = scalar_select %p31, %s32, %s33
      %p37 = pneg %p31
      %p38 = scmp.eq.s32.totalorder %s22, 1
      %p39 = por %p37, %p38
      %p40 = scmp.ne.s32.totalorder %s32, %s35
      %p41 = scmp.eq.s32.totalorder %s22, 0
      %p42 = por %p40, %p41
      %p43 = scmp.ne.s32.totalorder %s32, %s35
      %p44 = scmp.eq.s32.totalorder %s27, 1
      %p45 = por %p43, %p44
      %p46 = scmp.ne.s32.totalorder %s35, %s36
      %p47 = scmp.eq.s32.totalorder %s27, 0
      %p48 = por %p46, %p47
      %p49 = scmp.ne.s32.totalorder %s35, %s36
      %p50 = scmp.eq.s32.totalorder %s28, 1
      %p51 = por %p49, %p50
      %p53 = scmp.ne.s32.totalorder %s36, %s52
      %p54 = scmp.eq.s32.totalorder %s28, 0
      %p55 = por %p53, %p54
      %s57 = sadd.s32 %s56, 1
      %p60 = scmp.eq.s32.totalorder %s22, 1
      %p61 = scmp.ne.s32.totalorder %s56, %s58
      %p62 = scmp.eq.s32.totalorder %s22, 0
      %p63 = por %p61, %p62
      %p64 = scmp.ne.s32.totalorder %s56, %s58
      %p65 = scmp.eq.s32.totalorder %s27, 1
      %p66 = por %p64, %p65
      %p67 = scmp.ne.s32.totalorder %s58, %s59
      %p68 = scmp.eq.s32.totalorder %s27, 0
      %p69 = por %p67, %p68
      %p70 = scmp.ne.s32.totalorder %s58, %s59
      %p71 = scmp.eq.s32.totalorder %s28, 1
      %p72 = por %p70, %p71
      %p74 = scmp.ne.s32.totalorder %s59, %s73
      %p75 = scmp.eq.s32.totalorder %s28, 0
      %p76 = por %p74, %p75
      %s78 = sadd.s32 %s77, 1
      %p81 = scmp.eq.s32.totalorder %s22, 1
      %p82 = scmp.ne.s32.totalorder %s77, %s79
      %p83 = scmp.eq.s32.totalorder %s22, 0
      %p84 = por %p82, %p83
      %p85 = scmp.ne.s32.totalorder %s77, %s79
      %p86 = scmp.eq.s32.totalorder %s27, 1
      %p87 = por %p85, %p86
      %p88 = scmp.ne.s32.totalorder %s79, %s80
      %p89 = scmp.eq.s32.totalorder %s27, 0
      %p90 = por %p88, %p89
      %p91 = scmp.ne.s32.totalorder %s79, %s80
      %p92 = scmp.eq.s32.totalorder %s28, 1
      %p93 = por %p91, %p92
      %p95 = scmp.ne.s32.totalorder %s80, %s94
      %p96 = scmp.eq.s32.totalorder %s28, 0
      %p97 = por %p95, %p96
      %s99 = sadd.s32 %s98, 1
      %p102 = scmp.eq.s32.totalorder %s22, 1
      %p103 = scmp.ne.s32.totalorder %s98, %s100
      %p104 = scmp.eq.s32.totalorder %s22, 0
      %p105 = por %p103, %p104
      %p106 = scmp.ne.s32.totalorder %s98, %s100
      %p107 = scmp.eq.s32.totalorder %s27, 1
      %p108 = por %p106, %p107
      %p109 = scmp.ne.s32.totalorder %s100, %s101
      %p110 = scmp.eq.s32.totalorder %s27, 0
      %p111 = por %p109, %p110
      %p112 = scmp.ne.s32.totalorder %s100, %s101
      %p113 = scmp.eq.s32.totalorder %s28, 1
      %p114 = por %p112, %p113
      %p116 = scmp.ne.s32.totalorder %s101, %s115
      %p117 = scmp.eq.s32.totalorder %s28, 0
      %p118 = por %p116, %p117
      %s120 = sadd.s32 %s119, 1
      %p123 = scmp.eq.s32.totalorder %s22, 1
      %p124 = scmp.ne.s32.totalorder %s119, %s121
      %p125 = scmp.eq.s32.totalorder %s22, 0
      %p126 = por %p124, %p125
      %p127 = scmp.ne.s32.totalorder %s119, %s121
      %p128 = scmp.eq.s32.totalorder %s27, 1
      %p129 = por %p127, %p128
      %p130 = scmp.ne.s32.totalorder %s121, %s122
      %p131 = scmp.eq.s32.totalorder %s27, 0
      %p132 = por %p130, %p131
      %p133 = scmp.ne.s32.totalorder %s121, %s122
      %p134 = scmp.eq.s32.totalorder %s28, 1
      %p135 = por %p133, %p134
      %p137 = scmp.ne.s32.totalorder %s122, %s136
      %p138 = scmp.eq.s32.totalorder %s28, 0
      %p139 = por %p137, %p138
      %s140 = ssub.s32 %s22, %s29
      %p141 = scmp.eq.s32.totalorder %s140, 0
      %s143 = sadd.s32 %s142, 1
      %s144 = scalar_select %p141, %s142, %s143
      %p147 = pneg %p141
      %p148 = scmp.eq.s32.totalorder %s22, 1
      %p149 = por %p147, %p148
      %p150 = scmp.ne.s32.totalorder %s142, %s145
      %p151 = scmp.eq.s32.totalorder %s22, 0
      %p152 = por %p150, %p151
      %p153 = scmp.ne.s32.totalorder %s142, %s145
      %p154 = scmp.eq.s32.totalorder %s27, 1
      %p155 = por %p153, %p154
      %p156 = scmp.ne.s32.totalorder %s145, %s146
      %p157 = scmp.eq.s32.totalorder %s27, 0
      %p158 = por %p156, %p157
      %p159 = scmp.ne.s32.totalorder %s145, %s146
      %p160 = scmp.eq.s32.totalorder %s28, 1
      %p161 = por %p159, %p160
      %p163 = scmp.ne.s32.totalorder %s146, %s162
      %p164 = scmp.eq.s32.totalorder %s28, 0
      %p165 = por %p163, %p164
      %s166 = ssub.s32 %s22, %s29
      %p167 = scmp.eq.s32.totalorder %s166, 0
      %s169 = sadd.s32 %s168, 1
      %s170 = scalar_select %p167, %s168, %s169
      %p173 = pneg %p167
      %p174 = scmp.eq.s32.totalorder %s22, 1
      %p175 = por %p173, %p174
      %p176 = scmp.ne.s32.totalorder %s168, %s171
      %p177 = scmp.eq.s32.totalorder %s22, 0
      %p178 = por %p176, %p177
      %p179 = scmp.ne.s32.totalorder %s168, %s171
      %p180 = scmp.eq.s32.totalorder %s27, 1
      %p181 = por %p179, %p180
      %p182 = scmp.ne.s32.totalorder %s171, %s172
      %p183 = scmp.eq.s32.totalorder %s27, 0
      %p184 = por %p182, %p183
      %p185 = scmp.ne.s32.totalorder %s171, %s172
      %p186 = scmp.eq.s32.totalorder %s28, 1
      %p187 = por %p185, %p186
      %p189 = scmp.ne.s32.totalorder %s172, %s188
      %p190 = scmp.eq.s32.totalorder %s28, 0
      %p191 = por %p189, %p190
      %p192 = scmp.le.s32.totalorder 1, %s22
      %p193 = scmp.lt.s32.totalorder %s22, 3
      %p194 = pnand %p192, %p193
      %p195 = pneg %p194
      // Predicated region
      $region9: #{tpu_custom_call.1} parent=5 // pred_check
        _
      $region10: #{tpu_custom_call.1} parent=5 // pred_check_branch
        %197 = sbr.rel (%p194) target = $region12
      $region11: #{tpu_custom_call.1} parent=5 // pred_region
        %s198 = ssub.s32 %s22, 1
        // Predicated region
        $region13: #{tpu_custom_call.1} parent=11 // pred_check
          %p199 = pneg %p69
        $region14: #{tpu_custom_call.1} parent=11 // pred_check_branch
          %201 = sbr.rel (%p199) target = $region16
        $region15: #{tpu_custom_call.1} parent=11 // pred_region
          _
        $region16: #{tpu_custom_call.1} parent=11 // pred_fallthru
          _
        // Predicated region
        $region17: #{tpu_custom_call.1} parent=11 // pred_check
          %p202 = pneg %p90
        $region18: #{tpu_custom_call.1} parent=11 // pred_check_branch
          %204 = sbr.rel (%p202) target = $region20
        $region19: #{tpu_custom_call.1} parent=11 // pred_region
          _
        $region20: #{tpu_custom_call.1} parent=11 // pred_fallthru
          _
        // Predicated region
        $region21: #{tpu_custom_call.1} parent=11 // pred_check
          %p205 = pneg %p111
        $region22: #{tpu_custom_call.1} parent=11 // pred_check_branch
          %207 = sbr.rel (%p205) target = $region24
        $region23: #{tpu_custom_call.1} parent=11 // pred_region
          _
        $region24: #{tpu_custom_call.1} parent=11 // pred_fallthru
          _
        // Predicated region
        $region25: #{tpu_custom_call.1} parent=11 // pred_check
          %p208 = pneg %p132
        $region26: #{tpu_custom_call.1} parent=11 // pred_check_branch
          %210 = sbr.rel (%p208) target = $region28
        $region27: #{tpu_custom_call.1} parent=11 // pred_region
          _
        $region28: #{tpu_custom_call.1} parent=11 // pred_fallthru
          _
      $region12: #{tpu_custom_call.1} parent=5 // pred_fallthru
        _
      %p211 = scmp.lt.s32.totalorder %s22, 2
      // Predicated region
      $region29: #{tpu_custom_call.1} parent=5 // pred_check
        %p212 = pneg %p211
      $region30: #{tpu_custom_call.1} parent=5 // pred_check_branch
        %214 = sbr.rel (%p212) target = $region32
      $region31: #{tpu_custom_call.1} parent=5 // pred_region
        // Predicated region
        $region33: #{tpu_custom_call.1} parent=31 // pred_check
          %p215 = pneg %p42
        $region34: #{tpu_custom_call.1} parent=31 // pred_check_branch
          %217 = sbr.rel (%p215) target = $region36
        $region35: #{tpu_custom_call.1} parent=31 // pred_region
          %s218 = sand.u32 %s32, 1
          %s219 = scalar_lea.sflag [#allocation3], %s218
          %s220 = sand.u32 %s32, 1
          %s221 = smul.addr %s220, 8
          %s222 = scalar_lea.vmem [#allocation2], %s221
          %s224 = ssub.s32 128, 128
          %225 = vsyncadd %s219, %s224
          %s226 = smul.addr %s22, 2
          %s227 = smul.addr %s226, 64
          %s228 = scalar_lea.hbm %s0, %s227
          %s230 = sshll.u32 %s222, 4
          %s231 = int_to_ptr.vmem [resolvable:$true] %s230
          %233 = dma.hbm_to_vmem [thread:$0]  %s228, 128, %s231, %s219
        $region36: #{tpu_custom_call.1} parent=31 // pred_fallthru
          _
      $region32: #{tpu_custom_call.1} parent=5 // pred_fallthru
        _
      %p234 = scmp.le.s32.totalorder 1, %s22
      %p235 = scmp.lt.s32.totalorder %s22, 3
      %p236 = pnand %p234, %p235
      %p237 = pneg %p236
      // Predicated region
      $region37: #{tpu_custom_call.1} parent=5 // pred_check
        _
      $region38: #{tpu_custom_call.1} parent=5 // pred_check_branch
        %239 = sbr.rel (%p236) target = $region40
      $region39: #{tpu_custom_call.1} parent=5 // pred_region
        %s240 = ssub.s32 %s22, 1
        %s241 = sand.u32 %s35, 1
        %s242 = scalar_lea.sflag [#allocation3], %s241
        %s243 = sand.u32 %s35, 1
        %s244 = smul.addr %s243, 8
        %s245 = scalar_lea.vmem [#allocation2], %s244
        // Predicated region
        $region41: #{tpu_custom_call.1} parent=39 // pred_check
          %p246 = pneg %p48
        $region42: #{tpu_custom_call.1} parent=39 // pred_check_branch
          %248 = sbr.rel (%p246) target = $region44
        $region43: #{tpu_custom_call.1} parent=39 // pred_region
          %249 = dma.done %s242, 128
        $region44: #{tpu_custom_call.1} parent=39 // pred_fallthru
          _
        %s250 = sand.u32 %s35, 1
        %s251 = scalar_lea.sflag [#allocation3], %s250
        %s252 = sand.u32 %s35, 1
        %s253 = smul.addr %s252, 8
        %s254 = scalar_lea.vmem [#allocation2], %s253
        %p255 = pneg %p48
        %p256 = pneg %p45
        %p257 = pneg %p69
        %p258 = pneg %p66
        %p259 = pneg %p90
        %p260 = pneg %p87
        %p261 = pneg %p111
        %p262 = pneg %p108
        %p263 = pneg %p132
        %p264 = pneg %p129
        %p265 = pneg %p158
        %p266 = pneg %p155
        %s267 = sand.u32 %s145, 1
        %s268 = scalar_lea.sflag [#allocation4], %s267
        %s269 = sand.u32 %s145, 1
        %s270 = smul.addr %s269, 8
        %s271 = scalar_lea.vmem [#allocation5], %s270
        %p272 = pneg %p184
        %p273 = pneg %p181
        %s274 = sand.u32 %s171, 1
        %s275 = scalar_lea.sflag [#allocation7], %s274
        %s276 = sand.u32 %s171, 1
        %s277 = smul.addr %s276, 2
        %s278 = scalar_lea.vmem [#allocation6], %s277
        %v279 = vld [vmem:[%s1] sm:$0xff]
        %v280 = vld [vmem:[%s1 + $0x8] sm:$0xff]
        %v281 = vld [vmem:[%s1 + $0x10] sm:$0xff]
        %v282 = vld [vmem:[%s1 + $0x18] sm:$0xff]
        %v283 = vld [vmem:[%s1 + $0x20] sm:$0xff]
        %v284 = vld [vmem:[%s1 + $0x28] sm:$0xff]
        %v285 = vld [vmem:[%s1 + $0x30] sm:$0xff]
        %v286 = vld [vmem:[%s1 + $0x38] sm:$0xff]
        %v287 = vld [vmem:[%s2] sm:$0xff]
        %v288 = vld [vmem:[%s2 + $0x8] sm:$0xff]
        %v289 = vld [vmem:[%s2 + $0x10] sm:$0xff]
        %v290 = vld [vmem:[%s2 + $0x18] sm:$0xff]
        %v291 = vld [vmem:[%s2 + $0x20] sm:$0xff]
        %v292 = vld [vmem:[%s2 + $0x28] sm:$0xff]
        %v293 = vld [vmem:[%s2 + $0x30] sm:$0xff]
        %v294 = vld [vmem:[%s2 + $0x38] sm:$0xff]
        %v295 = vld [vmem:[%s3] sm:$0xff]
        %v296 = vld [vmem:[%s3 + $0x8] sm:$0xff]
        %v297 = vld [vmem:[%s3 + $0x10] sm:$0xff]
        %v298 = vld [vmem:[%s3 + $0x18] sm:$0xff]
        %v299 = vld [vmem:[%s3 + $0x20] sm:$0xff]
        %v300 = vld [vmem:[%s3 + $0x28] sm:$0xff]
        %v301 = vld [vmem:[%s3 + $0x30] sm:$0xff]
        %v302 = vld [vmem:[%s3 + $0x38] sm:$0xff]
        %v303 = vld [vmem:[%s3 + $0x40] sm:$0xff]
        %v304 = vld [vmem:[%s3 + $0x48] sm:$0xff]
        %v305 = vld [vmem:[%s3 + $0x50] sm:$0xff]
        %v306 = vld [vmem:[%s3 + $0x58] sm:$0xff]
        %v307 = vld [vmem:[%s3 + $0x60] sm:$0xff]
        %v308 = vld [vmem:[%s3 + $0x68] sm:$0xff]
        %v309 = vld [vmem:[%s3 + $0x70] sm:$0xff]
        %v310 = vld [vmem:[%s3 + $0x78] sm:$0xff]
        %v311 = vld [vmem:[%s4] sm:$0x3]
        %v312 = vld [vmem:[%s245] sm:$0xff]
        %314 = vset.pattern.permute.xlu0 0
        %315 = vperm.xlu0 %314, %v287
        %v316 = vpop.permute.xlu0 %315
        %319 = vset.pattern.permute.xlu0 0
        %320 = vperm.xlu0 %319, %v288
        %v321 = vpop.permute.xlu0 %320
        %324 = vset.pattern.permute.xlu0 0
        %325 = vperm.xlu0 %324, %v289
        %v326 = vpop.permute.xlu0 %325
        %329 = vset.pattern.permute.xlu0 0
        %330 = vperm.xlu0 %329, %v290
        %v331 = vpop.permute.xlu0 %330
        %334 = vset.pattern.permute.xlu0 0
        %335 = vperm.xlu0 %334, %v291
        %v336 = vpop.permute.xlu0 %335
        %339 = vset.pattern.permute.xlu0 0
        %340 = vperm.xlu0 %339, %v292
        %v341 = vpop.permute.xlu0 %340
        %344 = vset.pattern.permute.xlu0 0
        %345 = vperm.xlu0 %344, %v293
        %v346 = vpop.permute.xlu0 %345
        %349 = vset.pattern.permute.xlu0 0
        %350 = vperm.xlu0 %349, %v294
        %v351 = vpop.permute.xlu0 %350
        %v354 = vcombine.high %v312, %v312
        %vm355 = vcmask 31744
        %v357 = vsel %vm355, %v279, 0
        %v360 = vsel %vm355, %v280, 0
        %v363 = vsel %vm355, %v281, 0
        %v366 = vsel %vm355, %v282, 0
        %v369 = vsel %vm355, %v283, 0
        %v372 = vsel %vm355, %v284, 0
        %v375 = vsel %vm355, %v285, 0
        %v378 = vsel %vm355, %v286, 0
        %vm380 = vcmask 1043456
        %v381 = vsel %vm380, %v312, 0
        %v383 = vsel %vm380, %v354, 0
        %385 = vmatprep.subr.mxu0 0.0
        %386 = vmatpush1.msra.mxu0 0.0
        %387 = vmatprep.subr.mxu0 0.0
        %388 = vmatpush1.msra.mxu0 0.0
        %389 = vmatprep.subr.mxu0 0.0
        %390 = vmatpush1.msra.mxu0 0.0
        %391 = vmatprep.subr.mxu0 0.0
        %392 = vmatpush1.msra.mxu0 0.0
        %393 = vmatprep.subr.mxu0 0.0
        %394 = vmatpush1.msra.mxu0 0.0
        %395 = vmatprep.subr.mxu0 0.0
        %396 = vmatpush1.msra.mxu0 0.0
        %397 = vmatprep.subr.mxu0 0.0
        %398 = vmatpush1.msra.mxu0 0.0
        %399 = vmatprep.subr.mxu0 0.0
        %400 = vmatpush1.msra.mxu0 0.0
        %401 = vmatprep.subr.mxu0 0.0
        %402 = vmatpush1.msra.mxu0 0.0
        %403 = vmatprep.subr.mxu0 0.0
        %404 = vmatpush1.msra.mxu0 0.0
        %405 = vmatprep.subr.mxu0 0.0
        %406 = vmatpush1.msra.mxu0 0.0
        %407 = vmatprep.subr.mxu0 0.0
        %408 = vmatpush1.msra.mxu0 0.0
        %409 = vmatprep.subr.mxu0 0.0
        %410 = vmatpush1.msra.mxu0 0.0
        %411 = vmatprep.subr.mxu0 0.0
        %412 = vmatpush1.msra.mxu0 0.0
        %413 = vmatprep.subr.mxu0 0.0
        %414 = vmatpush1.msra.mxu0 0.0
        %415 = vmatprep.subr.mxu0 %v383
        %416 = vmatpush1.msra.mxu0 %v381
        %417 = vmatprep.subr.mxu0 0.0
        %418 = vmatpush2.msra.mxu0 0.0
        %419 = vmatprep.subr.mxu0 0.0
        %420 = vmatpush2.msra.mxu0 0.0
        %421 = vmatprep.subr.mxu0 0.0
        %422 = vmatpush2.msra.mxu0 0.0
        %423 = vmatprep.subr.mxu0 0.0
        %424 = vmatpush2.msra.mxu0 0.0
        %425 = vmatprep.subr.mxu0 0.0
        %426 = vmatpush2.msra.mxu0 0.0
        %427 = vmatprep.subr.mxu0 0.0
        %428 = vmatpush2.msra.mxu0 0.0
        %429 = vmatprep.subr.mxu0 0.0
        %430 = vmatpush2.msra.mxu0 0.0
        %431 = vmatprep.subr.mxu0 0.0
        %432 = vmatpush2.msra.mxu0 0.0
        %433 = vmatprep.subr.mxu0 0.0
        %434 = vmatpush2.msra.mxu0 0.0
        %435 = vmatprep.subr.mxu0 0.0
        %436 = vmatpush2.msra.mxu0 0.0
        %437 = vmatprep.subr.mxu0 0.0
        %438 = vmatpush2.msra.mxu0 0.0
        %439 = vmatprep.subr.mxu0 0.0
        %440 = vmatpush2.msra.mxu0 0.0
        %441 = vmatprep.subr.mxu0 0.0
        %442 = vmatpush2.msra.mxu0 0.0
        %443 = vmatprep.subr.mxu0 0.0
        %444 = vmatpush2.msra.mxu0 0.0
        %445 = vmatprep.subr.mxu0 0.0
        %446 = vmatpush2.msra.mxu0 0.0
        %447 = vmatprep.subr.mxu0 0.0
        %448 = vmatpush2.msra.mxu0 0.0
        %449 = vmatprep.mubr.f32.mxu0 0.0
        %450 = vmatmul.mubr.f32.gmra.mxu0 %v357
        %v451 = vpop.f32.mrf.mxu0
        %v452 = vadd.f32 %v316, %v451
        %v453 = vpop.f32.mrf.mxu0
        %v454 = vadd.f32 %v316, %v453
        %455 = vmatprep.mubr.f32.mxu0 0.0
        %456 = vmatmul.mubr.f32.gmra.mxu0 %v360
        %v457 = vpop.f32.mrf.mxu0
        %v458 = vadd.f32 %v321, %v457
        %v459 = vpop.f32.mrf.mxu0
        %v460 = vadd.f32 %v321, %v459
        %461 = vmatprep.mubr.f32.mxu0 0.0
        %462 = vmatmul.mubr.f32.gmra.mxu0 %v363
        %v463 = vpop.f32.mrf.mxu0
        %v464 = vadd.f32 %v326, %v463
        %v465 = vpop.f32.mrf.mxu0
        %v466 = vadd.f32 %v326, %v465
        %467 = vmatprep.mubr.f32.mxu0 0.0
        %468 = vmatmul.mubr.f32.gmra.mxu0 %v366
        %v469 = vpop.f32.mrf.mxu0
        %v470 = vadd.f32 %v331, %v469
        %v471 = vpop.f32.mrf.mxu0
        %v472 = vadd.f32 %v331, %v471
        %473 = vmatprep.mubr.f32.mxu0 0.0
        %474 = vmatmul.mubr.f32.gmra.mxu0 %v369
        %v475 = vpop.f32.mrf.mxu0
        %v476 = vadd.f32 %v336, %v475
        %v477 = vpop.f32.mrf.mxu0
        %v478 = vadd.f32 %v336, %v477
        %479 = vmatprep.mubr.f32.mxu0 0.0
        %480 = vmatmul.mubr.f32.gmra.mxu0 %v372
        %v481 = vpop.f32.mrf.mxu0
        %v482 = vadd.f32 %v341, %v481
        %v483 = vpop.f32.mrf.mxu0
        %v484 = vadd.f32 %v341, %v483
        %485 = vmatprep.mubr.f32.mxu0 0.0
        %486 = vmatmul.mubr.f32.gmra.mxu0 %v375
        %v487 = vpop.f32.mrf.mxu0
        %v488 = vadd.f32 %v346, %v487
        %v489 = vpop.f32.mrf.mxu0
        %v490 = vadd.f32 %v346, %v489
        %491 = vmatprep.mubr.f32.mxu0 0.0
        %492 = vmatmul.mubr.f32.gmra.mxu0 %v378
        %v493 = vpop.f32.mrf.mxu0
        %v494 = vadd.f32 %v351, %v493
        %v495 = vpop.f32.mrf.mxu0
        %v496 = vadd.f32 %v351, %v495
        %497 = vdwg.mxu0
        %v498 = vxor.u32 %v452, 2147483648
        %v499 = vxor.u32 %v454, 2147483648
        %v500 = vxor.u32 %v458, 2147483648
        %v501 = vxor.u32 %v460, 2147483648
        %v502 = vxor.u32 %v464, 2147483648
        %v503 = vxor.u32 %v466, 2147483648
        %v504 = vxor.u32 %v470, 2147483648
        %v505 = vxor.u32 %v472, 2147483648
        %v506 = vxor.u32 %v476, 2147483648
        %v507 = vxor.u32 %v478, 2147483648
        %v508 = vxor.u32 %v482, 2147483648
        %v509 = vxor.u32 %v484, 2147483648
        %v510 = vxor.u32 %v488, 2147483648
        %v511 = vxor.u32 %v490, 2147483648
        %v512 = vxor.u32 %v494, 2147483648
        %v513 = vxor.u32 %v496, 2147483648
        %v514 = vmul.f32 %v498, 1.442695
        %v515 = vpow.pop %v514
        %v516 = vmul.f32 %v499, 1.442695
        %v517 = vpow.pop %v516
        %v518 = vmul.f32 %v500, 1.442695
        %v519 = vpow.pop %v518
        %v520 = vmul.f32 %v501, 1.442695
        %v521 = vpow.pop %v520
        %v522 = vmul.f32 %v502, 1.442695
        %v523 = vpow.pop %v522
        %v524 = vmul.f32 %v503, 1.442695
        %v525 = vpow.pop %v524
        %v526 = vmul.f32 %v504, 1.442695
        %v527 = vpow.pop %v526
        %v528 = vmul.f32 %v505, 1.442695
        %v529 = vpow.pop %v528
        %v530 = vmul.f32 %v506, 1.442695
        %v531 = vpow.pop %v530
        %v532 = vmul.f32 %v507, 1.442695
        %v533 = vpow.pop %v532
        %v534 = vmul.f32 %v508, 1.442695
        %v535 = vpow.pop %v534
        %v536 = vmul.f32 %v509, 1.442695
        %v537 = vpow.pop %v536
        %v538 = vmul.f32 %v510, 1.442695
        %v539 = vpow.pop %v538
        %v540 = vmul.f32 %v511, 1.442695
        %v541 = vpow.pop %v540
        %v542 = vmul.f32 %v512, 1.442695
        %v543 = vpow.pop %v542
        %v544 = vmul.f32 %v513, 1.442695
        %v545 = vpow.pop %v544
        %v546 = vadd.f32 %v515, 1.0
        %v547 = vadd.f32 %v517, 1.0
        %v548 = vadd.f32 %v519, 1.0
        %v549 = vadd.f32 %v521, 1.0
        %v550 = vadd.f32 %v523, 1.0
        %v551 = vadd.f32 %v525, 1.0
        %v552 = vadd.f32 %v527, 1.0
        %v553 = vadd.f32 %v529, 1.0
        %v554 = vadd.f32 %v531, 1.0
        %v555 = vadd.f32 %v533, 1.0
        %v556 = vadd.f32 %v535, 1.0
        %v557 = vadd.f32 %v537, 1.0
        %v558 = vadd.f32 %v539, 1.0
        %v559 = vadd.f32 %v541, 1.0
        %v560 = vadd.f32 %v543, 1.0
        %v561 = vadd.f32 %v545, 1.0
        %v562 = vrcp.pop %v546
        %v563 = vmul.f32 1.0, %v562
        %v564 = vrcp.pop %v547
        %v565 = vmul.f32 1.0, %v564
        %v566 = vrcp.pop %v548
        %v567 = vmul.f32 1.0, %v566
        %v568 = vrcp.pop %v549
        %v569 = vmul.f32 1.0, %v568
        %v570 = vrcp.pop %v550
        %v571 = vmul.f32 1.0, %v570
        %v572 = vrcp.pop %v551
        %v573 = vmul.f32 1.0, %v572
        %v574 = vrcp.pop %v552
        %v575 = vmul.f32 1.0, %v574
        %v576 = vrcp.pop %v553
        %v577 = vmul.f32 1.0, %v576
        %v578 = vrcp.pop %v554
        %v579 = vmul.f32 1.0, %v578
        %v580 = vrcp.pop %v555
        %v581 = vmul.f32 1.0, %v580
        %v582 = vrcp.pop %v556
        %v583 = vmul.f32 1.0, %v582
        %v584 = vrcp.pop %v557
        %v585 = vmul.f32 1.0, %v584
        %v586 = vrcp.pop %v558
        %v587 = vmul.f32 1.0, %v586
        %v588 = vrcp.pop %v559
        %v589 = vmul.f32 1.0, %v588
        %v590 = vrcp.pop %v560
        %v591 = vmul.f32 1.0, %v590
        %v592 = vrcp.pop %v561
        %v593 = vmul.f32 1.0, %v592
        %v594 = vmul.f32 %v452, %v563
        %v595 = vmul.f32 %v454, %v565
        %v596 = vmul.f32 %v458, %v567
        %v597 = vmul.f32 %v460, %v569
        %v598 = vmul.f32 %v464, %v571
        %v599 = vmul.f32 %v466, %v573
        %v600 = vmul.f32 %v470, %v575
        %v601 = vmul.f32 %v472, %v577
        %v602 = vmul.f32 %v476, %v579
        %v603 = vmul.f32 %v478, %v581
        %v604 = vmul.f32 %v482, %v583
        %v605 = vmul.f32 %v484, %v585
        %v606 = vmul.f32 %v488, %v587
        %v607 = vmul.f32 %v490, %v589
        %v608 = vmul.f32 %v494, %v591
        %v609 = vmul.f32 %v496, %v593
        %v610 = vadd.f32 %v594, %v595
        %611 = vadd.xlane.f32.xlu0 %v610
        %v612 = vpop.xlane.xlu0 %611
        %v613 = vadd.f32 %v596, %v597
        %614 = vadd.xlane.f32.xlu0 %v613
        %v615 = vpop.xlane.xlu0 %614
        %v616 = vadd.f32 %v598, %v599
        %617 = vadd.xlane.f32.xlu0 %v616
        %v618 = vpop.xlane.xlu0 %617
        %v619 = vadd.f32 %v600, %v601
        %620 = vadd.xlane.f32.xlu0 %v619
        %v621 = vpop.xlane.xlu0 %620
        %v622 = vadd.f32 %v602, %v603
        %623 = vadd.xlane.f32.xlu0 %v622
        %v624 = vpop.xlane.xlu0 %623
        %v625 = vadd.f32 %v604, %v605
        %626 = vadd.xlane.f32.xlu0 %v625
        %v627 = vpop.xlane.xlu0 %626
        %v628 = vadd.f32 %v606, %v607
        %629 = vadd.xlane.f32.xlu0 %v628
        %v630 = vpop.xlane.xlu0 %629
        %v631 = vadd.f32 %v608, %v609
        %632 = vadd.xlane.f32.xlu0 %v631
        %v633 = vpop.xlane.xlu0 %632
        %v634 = vmul.f32 %v612, %v295
        %v635 = vmul.f32 %v612, %v296
        %v636 = vmul.f32 %v615, %v297
        %v637 = vmul.f32 %v615, %v298
        %v638 = vmul.f32 %v618, %v299
        %v639 = vmul.f32 %v618, %v300
        %v640 = vmul.f32 %v621, %v301
        %v641 = vmul.f32 %v621, %v302
        %v642 = vmul.f32 %v624, %v303
        %v643 = vmul.f32 %v624, %v304
        %v644 = vmul.f32 %v627, %v305
        %v645 = vmul.f32 %v627, %v306
        %v646 = vmul.f32 %v630, %v307
        %v647 = vmul.f32 %v630, %v308
        %v648 = vmul.f32 %v633, %v309
        %v649 = vmul.f32 %v633, %v310
        %v650 = vadd.f32 %v634, %v636
        %v651 = vadd.f32 %v650, %v638
        %v652 = vadd.f32 %v651, %v640
        %v653 = vadd.f32 %v652, %v642
        %v654 = vadd.f32 %v653, %v644
        %v655 = vadd.f32 %v654, %v646
        %v656 = vadd.f32 %v655, %v648
        %v657 = vrot.slane %v656, 4
        %v658 = vadd.f32 %v656, %v657
        %v659 = vrot.slane %v658, 2
        %v660 = vadd.f32 %v658, %v659
        %v661 = vrot.slane %v660, 1
        %v662 = vadd.f32 %v660, %v661
        %v663 = vadd.f32 %v635, %v637
        %v664 = vadd.f32 %v663, %v639
        %v665 = vadd.f32 %v664, %v641
        %v666 = vadd.f32 %v665, %v643
        %v667 = vadd.f32 %v666, %v645
        %v668 = vadd.f32 %v667, %v647
        %v669 = vadd.f32 %v668, %v649
        %v670 = vrot.slane %v669, 4
        %v671 = vadd.f32 %v669, %v670
        %v672 = vrot.slane %v671, 2
        %v673 = vadd.f32 %v671, %v672
        %v674 = vrot.slane %v673, 1
        %v675 = vadd.f32 %v673, %v674
        %v677 = vlaneseq
        %v678 = vshrl.u32 %v677, 7
        %v679 = vsub.s32 0, %v678
        %v680 = vrot.slane %v311, %v679
        %v681 = vlaneseq
        %v682 = vshrl.u32 %v681, 7
        %v683 = vsub.s32 1, %v682
        %v684 = vrot.slane %v311, %v683
        %v687 = vadd.f32 %v662, %v680
        %v688 = vadd.f32 %v675, %v684
        %v689 = vxor.u32 %v687, 2147483648
        %v690 = vxor.u32 %v688, 2147483648
        %v691 = vmul.f32 %v689, 1.442695
        %v692 = vpow.pop %v691
        %v693 = vmul.f32 %v690, 1.442695
        %v694 = vpow.pop %v693
        %v695 = vadd.f32 %v692, 1.0
        %v696 = vadd.f32 %v694, 1.0
        %v697 = vrcp.pop %v695
        %v698 = vmul.f32 1.0, %v697
        %v699 = vrcp.pop %v696
        %v700 = vmul.f32 1.0, %v699
        %v703 = vcombine.low %v698, %v700
        %v705 = vunpack.c.l.s4 1966171168
        %v706 = vunpack.c.0.s8 %v705
        %v707 = vlaneseq
        %v708 = vshrl.u32 %v707, 7
        %v709 = vsub.s32 %v706, %v708
        %v710 = vrot.slane %v703, %v709
        %v712 = vunpack.c.l.s4 1966171168
        %v713 = vunpack.c.0.s8 %v712
        %v714 = vlaneseq
        %v715 = vshrl.u32 %v714, 7
        %v716 = vsub.s32 %v713, %v715
        %v717 = vrot.slane %v710, %v716
        %v719 = vlaneseq
        %vm720 = vcmp.ge.s32.totalorder %v719, 0
        %vm721 = vcmp.lt.s32.totalorder %v719, 256
        %vm722 = vmand %vm720, %vm721
        %723 = vst.msk [vmem:[%s278] sm:$0x3] %vm722, %v717
        %v724 = vlaneseq
        %v725 = vshrl.u32 %v724, 7
        %v726 = vsub.s32 0, %v725
        %v727 = vrot.slane %v698, %v726
        %v728 = vlaneseq
        %v729 = vshrl.u32 %v728, 7
        %v730 = vsub.s32 0, %v729
        %v731 = vrot.slane %v700, %v730
        %v734 = vcombine.low %v727, %v731
        %v736 = vmul.f32 %v312, %v734
        %737 = vst [vmem:[%s271] sm:$0xff] %v736
        %s738 = sand.u32 %s145, 1
        %s739 = scalar_lea.sflag [#allocation4], %s738
        %s740 = sand.u32 %s145, 1
        %s741 = smul.addr %s740, 8
        %s742 = scalar_lea.vmem [#allocation5], %s741
        %s743 = sand.u32 %s171, 1
        %s744 = scalar_lea.sflag [#allocation7], %s743
        %s745 = sand.u32 %s171, 1
        %s746 = smul.addr %s745, 2
        %s747 = scalar_lea.vmem [#allocation6], %s746
        // Predicated region
        $region45: #{tpu_custom_call.1} parent=39 // pred_check
          %p748 = pneg %p155
        $region46: #{tpu_custom_call.1} parent=39 // pred_check_branch
          %750 = sbr.rel (%p748) target = $region48
        $region47: #{tpu_custom_call.1} parent=39 // pred_region
          %s752 = ssub.s32 128, 128
          %753 = vsyncadd %s739, %s752
          %s754 = smul.addr %s27, 2
          %s755 = smul.addr %s754, 64
          %s756 = scalar_lea.hbm %s5, %s755
          %s758 = sshll.u32 %s742, 4
          %s759 = int_to_ptr.vmem [resolvable:$true] %s758
          %761 = dma.vmem_to_hbm [thread:$0]  %s759, 128, %s756, %s739
        $region48: #{tpu_custom_call.1} parent=39 // pred_fallthru
          _
        // Predicated region
        $region49: #{tpu_custom_call.1} parent=39 // pred_check
          %p762 = pneg %p181
        $region50: #{tpu_custom_call.1} parent=39 // pred_check_branch
          %764 = sbr.rel (%p762) target = $region52
        $region51: #{tpu_custom_call.1} parent=39 // pred_region
          %s766 = ssub.s32 32, 32
          %767 = vsyncadd %s744, %s766
          %s768 = smul.addr %s27, 2
          %s769 = smul.addr %s768, 16
          %s770 = scalar_lea.hbm %s6, %s769
          %s772 = sshll.u32 %s747, 4
          %s773 = int_to_ptr.vmem [resolvable:$true] %s772
          %775 = dma.vmem_to_hbm [thread:$0]  %s773, 32, %s770, %s744
        $region52: #{tpu_custom_call.1} parent=39 // pred_fallthru
          _
      $region40: #{tpu_custom_call.1} parent=5 // pred_fallthru
        _
      %p776 = scmp.le.s32.totalorder 2, %s22
      // Predicated region
      $region53: #{tpu_custom_call.1} parent=5 // pred_check
        %p777 = pneg %p776
      $region54: #{tpu_custom_call.1} parent=5 // pred_check_branch
        %779 = sbr.rel (%p777) target = $region56
      $region55: #{tpu_custom_call.1} parent=5 // pred_region
        %s780 = ssub.s32 %s22, 2
        // Predicated region
        $region57: #{tpu_custom_call.1} parent=55 // pred_check
          %p781 = pneg %p161
        $region58: #{tpu_custom_call.1} parent=55 // pred_check_branch
          %783 = sbr.rel (%p781) target = $region60
        $region59: #{tpu_custom_call.1} parent=55 // pred_region
          %s784 = sand.u32 %s146, 1
          %s785 = scalar_lea.sflag [#allocation4], %s784
          %s786 = sand.u32 %s146, 1
          %s787 = smul.addr %s786, 8
          %s788 = scalar_lea.vmem [#allocation5], %s787
          %789 = dma.done %s785, 128
        $region60: #{tpu_custom_call.1} parent=55 // pred_fallthru
          _
        // Predicated region
        $region61: #{tpu_custom_call.1} parent=55 // pred_check
          %p790 = pneg %p187
        $region62: #{tpu_custom_call.1} parent=55 // pred_check_branch
          %792 = sbr.rel (%p790) target = $region64
        $region63: #{tpu_custom_call.1} parent=55 // pred_region
          %s793 = sand.u32 %s172, 1
          %s794 = scalar_lea.sflag [#allocation7], %s793
          %s795 = sand.u32 %s172, 1
          %s796 = smul.addr %s795, 2
          %s797 = scalar_lea.vmem [#allocation6], %s796
          %798 = dma.done %s794, 32
        $region64: #{tpu_custom_call.1} parent=55 // pred_fallthru
          _
      $region56: #{tpu_custom_call.1} parent=5 // pred_fallthru
        _
    $region6: #{tpu_custom_call.1} parent=1 // loop_footer
      %s26 = sadd.s32 1, %s22
    $region7: #{tpu_custom_call.1} parent=1 // loop_footer_branch
      %21 = sbr.rel target = $region3
    $region8: #{tpu_custom_call.1} parent=1 // loop_exit
      _
    %799 = vsyncpa [#allocation3], 1
    %s800 = scalar_lea.sflag [#allocation3], 1
    %801 = vsyncpa %s800, 1
    %802 = vsyncpa [#allocation4], 1
    %s803 = scalar_lea.sflag [#allocation4], 1
    %804 = vsyncpa %s803, 1
    %805 = vsyncpa [#allocation7], 1
    %s806 = scalar_lea.sflag [#allocation7], 1
    %807 = vsyncpa %s806, 1

</llo_original>
